<compile_context>
chip_gen: v6e
topology: v6e:2x2x1
jax: 0.10.0
libtpu: 0.0.40
codegen_flags: <defaults>
</compile_context>

<pallas_src>
import jax
import jax.numpy as jnp
from jax.experimental import pallas as pl
from jax.experimental.pallas import tpu as pltpu


def attention_kernel(enc_ref, att2_ref, weT_ref, be_ref, wf_ref,
                     awe_ref, alpha_ref):
    Bt, P, E = enc_ref.shape
    A = weT_ref.shape[1]

    enc = enc_ref[...]                                      # (Bt, P, E) bf16

    # encoder_att: one big MXU matmul, M = Bt*P rows, f32 accumulation.
    att1 = jnp.dot(enc.reshape(Bt * P, E), weT_ref[...],
                   preferred_element_type=jnp.float32)      # (Bt*P, A) f32
    att1 = att1.reshape(Bt, P, A)

    # relu(att1 + att2); att2 = decoder_att(decoder_hidden) precomputed in the
    # wrapper, shape (Bt, 1, A) -> broadcasts over the pixel axis.
    h = jnp.maximum(att1 + be_ref[...] + att2_ref[...], 0.0)   # (Bt, P, A) f32

    # full_att: contract A on the lane axis -> lane-dense (Bt, P) scores.
    # (b_f is a constant added to every score; softmax is shift-invariant, so
    #  it is dropped — mathematically a no-op.)
    att = jnp.sum(h * wf_ref[...], axis=-1)                 # (Bt, P) f32

    # softmax over the pixel axis (lane-axis reductions).
    m = jnp.max(att, axis=-1, keepdims=True)                # (Bt, 1)
    e = jnp.exp(att - m)
    denom = jnp.sum(e, axis=-1, keepdims=True)
    # exact reciprocal keeps tight numerics; approx=True is available if the
    # accuracy budget allows (moves the divide fully onto the idle EUP slot).
    alpha = e * pl.reciprocal(denom)                        # (Bt, P) f32

    # attention_weighted_encoding as an MXU matmul: (Bt, 1, P) @ (Bt, P, E).
    alpha3 = alpha[:, None, :]                              # (Bt, 1, P)
    awe = jnp.einsum("bqp,bpe->bqe", alpha3.astype(enc.dtype), enc,
                     preferred_element_type=jnp.float32)    # (Bt, 1, E) f32

    awe_ref[...] = awe.astype(awe_ref.dtype)
    alpha_ref[...] = alpha3.astype(alpha_ref.dtype)


def attention_forward(encoder_out, decoder_hidden, params, block_batch=None):
    """encoder_out: (B, P, E) f32; decoder_hidden: (B, D) f32.
    Returns (attention_weighted_encoding (B, E), alpha (B, P))."""
    B, P, E = encoder_out.shape
    A = params["W_e"].shape[0]

    # Hoisted decoder projection: one batched (B, D) @ (D, A) matmul in XLA.
    att2 = (decoder_hidden.astype(jnp.float32) @ params["W_d"].T
            + params["b_d"]).reshape(B, 1, A).astype(jnp.float32)

    # MXU inputs in bf16 (f32 accumulation inside the kernel); elementwise
    # operands stay f32.
    enc_bf16 = encoder_out.astype(jnp.bfloat16)
    weT = params["W_e"].T.astype(jnp.bfloat16)              # (E, A)
    be = params["b_e"].reshape(1, A).astype(jnp.float32)
    wf = params["W_f"].reshape(1, A).astype(jnp.float32)
    # b_f is dropped: uniform shift of the scores, no-op under softmax.

    # Pick a per-step batch tile so M = Bt*P fills the MXU, but prefer >=2 grid
    # steps (v7x has 2 TensorCores on the "parallel" axis) when that does not
    # shrink the MXU M dimension below ~256 rows.
    if block_batch is None:
        bt = max(1, min(B, max(1, 512 // max(P, 1))))
        while B // bt < 2 and bt > 1 and (-(-bt // 2)) * P >= 256:
            bt = -(-bt // 2)
    else:
        bt = max(1, min(B, block_batch))

    # Pad the batch so it divides evenly into Bt-sized tiles.
    Bp = -(-B // bt) * bt
    if Bp != B:
        enc_bf16 = jnp.pad(enc_bf16, ((0, Bp - B), (0, 0), (0, 0)))
        att2 = jnp.pad(att2, ((0, Bp - B), (0, 0), (0, 0)))
    grid = (Bp // bt,)

    # Explicit VMEM budget: 2x-buffered enc/att2/outputs + resident weights,
    # with margin, clamped to stay safe under v7x's 64 MiB physical VMEM.
    # (Weights could additionally be single-buffered via pipeline_mode on v7x.)
    est = (2 * (bt * P * E * 2 + bt * A * 4 + bt * E * 4 + bt * P * 4)
           + 2 * (E * A * 2 + 2 * A * 4)
           + 4 * bt * P * A * 4            # f32 intermediates (att1 / h)
           + (1 << 20))
    vmem_limit = int(min(max(2 * est, 32 * 1024 * 1024), 56 * 1024 * 1024))

    grid_spec = pltpu.PrefetchScalarGridSpec(
        num_scalar_prefetch=0,
        grid=grid,
        in_specs=[
            pl.BlockSpec((bt, P, E), lambda b: (b, 0, 0)),   # encoder_out (bf16)
            pl.BlockSpec((bt, 1, A), lambda b: (b, 0, 0)),   # precomputed att2
            pl.BlockSpec((E, A), lambda b: (0, 0)),          # W_e^T (bf16, resident)
            pl.BlockSpec((1, A), lambda b: (0, 0)),          # b_e
            pl.BlockSpec((1, A), lambda b: (0, 0)),          # W_f row
        ],
        out_specs=[
            pl.BlockSpec((bt, 1, E), lambda b: (b, 0, 0)),   # awe
            pl.BlockSpec((bt, 1, P), lambda b: (b, 0, 0)),   # alpha (lane-dense P)
        ],
    )

    awe3, alpha3 = pl.pallas_call(
        attention_kernel,
        out_shape=(
            jax.ShapeDtypeStruct((Bp, 1, E), jnp.float32),
            jax.ShapeDtypeStruct((Bp, 1, P), jnp.float32),
        ),
        grid_spec=grid_spec,
        compiler_params=pltpu.CompilerParams(
            dimension_semantics=("parallel",),
            vmem_limit_bytes=vmem_limit,
        ),
    )(enc_bf16, att2, weT, be, wf)

    return awe3[:B, 0, :], alpha3[:B, 0, :]


def reference_forward(encoder_out, decoder_hidden, params):
    att1 = encoder_out @ params["W_e"].T + params["b_e"]
    att2 = decoder_hidden @ params["W_d"].T + params["b_d"]
    h = jnp.maximum(att1 + att2[:, None, :], 0.0)
    att = (h @ params["W_f"].T + params["b_f"])[..., 0]
    alpha = jax.nn.softmax(att, axis=1)
    awe = (encoder_out * alpha[..., None]).sum(axis=1)
    return awe, alpha


if __name__ == "__main__":
    B, P, E, D, A = 2, 16, 32, 32, 32
    key = jax.random.PRNGKey(0)
    k = jax.random.split(key, 8)

    encoder_out = jax.random.normal(k[0], (B, P, E), jnp.float32)
    decoder_hidden = jax.random.normal(k[1], (B, D), jnp.float32)

    # Deterministic synthetic parameters (PyTorch nn.Linear shapes: (out, in) + (out,))
    params = {
        "W_e": 0.1 * jax.random.normal(k[2], (A, E), jnp.float32),
        "b_e": 0.1 * jax.random.normal(k[3], (A,), jnp.float32),
        "W_d": 0.1 * jax.random.normal(k[4], (A, D), jnp.float32),
        "b_d": 0.1 * jax.random.normal(k[5], (A,), jnp.float32),
        "W_f": 0.1 * jax.random.normal(k[6], (1, A), jnp.float32),
        "b_f": 0.1 * jax.random.normal(k[7], (1,), jnp.float32),
    }

    awe, alpha = attention_forward(encoder_out, decoder_hidden, params)
    jax.block_until_ready((awe, alpha))

    awe_ref, alpha_ref = reference_forward(encoder_out, decoder_hidden, params)
    assert awe.shape == (B, E) and alpha.shape == (B, P)
    # bf16 MXU inputs (f32 accumulation) -> compare to the f32 reference at a
    # tolerance matching bf16 input precision; softmax rows must still sum to 1.
    assert jnp.allclose(awe, awe_ref, atol=2e-2, rtol=2e-2)
    assert jnp.allclose(alpha, alpha_ref, atol=2e-2, rtol=2e-2)
    assert jnp.allclose(alpha.sum(axis=1), jnp.ones((B,), jnp.float32), atol=1e-3)

    print("KERNEL_OK")
</pallas_src>

<mosaic_0001>
module attributes {stable_mosaic.version = 11 : i64} {
  func.func @attention_kernel(%arg0: i32, %arg1: memref<2x16x32xbf16, #tpu.memory_space<vmem>>, %arg2: memref<2x1x32xf32, #tpu.memory_space<vmem>>, %arg3: memref<32x32xbf16, #tpu.memory_space<vmem>>, %arg4: memref<1x32xf32, #tpu.memory_space<vmem>>, %arg5: memref<1x32xf32, #tpu.memory_space<vmem>>, %arg6: memref<2x1x32xf32, #tpu.memory_space<vmem>>, %arg7: memref<2x1x16xf32, #tpu.memory_space<vmem>>) attributes {dimension_semantics = [#tpu.dimension_semantics<parallel>], iteration_bounds = array<i64: 1>, scalar_prefetch = 0 : i64, scratch_operands = 0 : i64, tpu.core_type = #tpu.core_type<tc>, window_params = [{transform_indices = @transform_0, window_bounds = array<i64: 2, 16, 32>}, {transform_indices = @transform_1, window_bounds = array<i64: 2, 1, 32>}, {pipeline_mode = #tpu.pipeline_mode<synchronous>, transform_indices = @transform_2, window_bounds = array<i64: 32, 32>}, {pipeline_mode = #tpu.pipeline_mode<synchronous>, transform_indices = @transform_3, window_bounds = array<i64: 1, 32>}, {pipeline_mode = #tpu.pipeline_mode<synchronous>, transform_indices = @transform_4, window_bounds = array<i64: 1, 32>}, {transform_indices = @transform_5, window_bounds = array<i64: 2, 1, 32>}, {transform_indices = @transform_6, window_bounds = array<i64: 2, 1, 16>}]} {
    %c0 = arith.constant 0 : index
    %c0_0 = arith.constant 0 : index
    %c0_1 = arith.constant 0 : index
    %0 = vector.load %arg1[%c0, %c0_0, %c0_1] : memref<2x16x32xbf16, #tpu.memory_space<vmem>>, vector<2x16x32xbf16>
    %1 = vector.shape_cast %0 : vector<2x16x32xbf16> to vector<32x32xbf16>
    %c0_2 = arith.constant 0 : index
    %c0_3 = arith.constant 0 : index
    %2 = vector.load %arg3[%c0_2, %c0_3] : memref<32x32xbf16, #tpu.memory_space<vmem>>, vector<32x32xbf16>
    %cst = arith.constant dense<0.000000e+00> : vector<32x32xf32>
    %3 = tpu.matmul %1, %2, %cst {dimension_numbers = #tpu.dot_dimension_numbers<[1], [0], [0], [1], [0, 0, 1, 1], [], []>} : vector<32x32xbf16>, vector<32x32xbf16>, vector<32x32xf32> -> vector<32x32xf32>
    %4 = vector.shape_cast %3 : vector<32x32xf32> to vector<2x16x32xf32>
    %c0_4 = arith.constant 0 : index
    %c0_5 = arith.constant 0 : index
    %5 = vector.load %arg4[%c0_4, %c0_5] : memref<1x32xf32, #tpu.memory_space<vmem>>, vector<1x32xf32>
    %6 = vector.shape_cast %5 : vector<1x32xf32> to vector<1x1x32xf32>
    %7 = vector.broadcast %6 : vector<1x1x32xf32> to vector<2x16x32xf32>
    %8 = arith.addf %4, %7 : vector<2x16x32xf32>
    %c0_6 = arith.constant 0 : index
    %c0_7 = arith.constant 0 : index
    %c0_8 = arith.constant 0 : index
    %9 = vector.load %arg2[%c0_6, %c0_7, %c0_8] : memref<2x1x32xf32, #tpu.memory_space<vmem>>, vector<2x1x32xf32>
    %10 = vector.broadcast %9 : vector<2x1x32xf32> to vector<2x16x32xf32>
    %11 = arith.addf %8, %10 : vector<2x16x32xf32>
    %cst_9 = arith.constant 0.000000e+00 : f32
    %12 = vector.broadcast %cst_9 : f32 to vector<2x16x32xf32>
    %13 = arith.maximumf %11, %12 : vector<2x16x32xf32>
    %c0_10 = arith.constant 0 : index
    %c0_11 = arith.constant 0 : index
    %14 = vector.load %arg5[%c0_10, %c0_11] : memref<1x32xf32, #tpu.memory_space<vmem>>, vector<1x32xf32>
    %15 = vector.shape_cast %14 : vector<1x32xf32> to vector<1x1x32xf32>
    %16 = vector.broadcast %15 : vector<1x1x32xf32> to vector<2x16x32xf32>
    %17 = arith.mulf %13, %16 : vector<2x16x32xf32>
    %cst_12 = arith.constant dense<0.000000e+00> : vector<2x16xf32>
    %18 = vector.multi_reduction <add>, %17, %cst_12 [2] : vector<2x16x32xf32> to vector<2x16xf32>
    %cst_13 = arith.constant dense<0xFF800000> : vector<2xf32>
    %19 = vector.multi_reduction <maximumf>, %18, %cst_13 [1] : vector<2x16xf32> to vector<2xf32>
    %20 = vector.shape_cast %19 : vector<2xf32> to vector<2x1xf32>
    %21 = vector.broadcast %20 : vector<2x1xf32> to vector<2x16xf32>
    %22 = arith.subf %18, %21 : vector<2x16xf32>
    %23 = math.exp %22 : vector<2x16xf32>
    %cst_14 = arith.constant dense<0.000000e+00> : vector<2xf32>
    %24 = vector.multi_reduction <add>, %23, %cst_14 [1] : vector<2x16xf32> to vector<2xf32>
    %25 = vector.shape_cast %24 : vector<2xf32> to vector<2x1xf32>
    %26 = tpu.reciprocal %25 : vector<2x1xf32> -> vector<2x1xf32>
    %27 = vector.broadcast %26 : vector<2x1xf32> to vector<2x16xf32>
    %28 = arith.mulf %23, %27 : vector<2x16xf32>
    %29 = vector.shape_cast %28 : vector<2x16xf32> to vector<2x1x16xf32>
    %30 = arith.truncf %29 : vector<2x1x16xf32> to vector<2x1x16xbf16>
    "tpu.trace_start"() <{level = 10 : i32, message = "bqp,bpe->bqe"}> : () -> ()
    %cst_15 = arith.constant dense<0.000000e+00> : vector<2x1x32xf32>
    %31 = tpu.matmul %30, %0, %cst_15 {dimension_numbers = #tpu.dot_dimension_numbers<[2], [1], [1], [2], [0, 0, 0, 1, 1, 2], [0], [0]>} : vector<2x1x16xbf16>, vector<2x16x32xbf16>, vector<2x1x32xf32> -> vector<2x1x32xf32>
    "tpu.trace_stop"() : () -> ()
    %c0_16 = arith.constant 0 : index
    %c0_17 = arith.constant 0 : index
    %c0_18 = arith.constant 0 : index
    %32 = vector.load %arg6[%c0_16, %c0_17, %c0_18] : memref<2x1x32xf32, #tpu.memory_space<vmem>>, vector<2x1x32xf32>
    tpu.vector_store %arg6[%c0_16, %c0_17, %c0_18], %31 {strides = array<i32>} : memref<2x1x32xf32, #tpu.memory_space<vmem>>, vector<2x1x32xf32>,
    %c0_19 = arith.constant 0 : index
    %c0_20 = arith.constant 0 : index
    %c0_21 = arith.constant 0 : index
    %33 = vector.load %arg7[%c0_19, %c0_20, %c0_21] : memref<2x1x16xf32, #tpu.memory_space<vmem>>, vector<2x1x16xf32>
    tpu.vector_store %arg7[%c0_19, %c0_20, %c0_21], %29 {strides = array<i32>} : memref<2x1x16xf32, #tpu.memory_space<vmem>>, vector<2x1x16xf32>,
    return
  }
  func.func @transform_0(%arg0: i32) -> (i32, i32, i32) {
    %c0_i32 = arith.constant 0 : i32
    %c0_i32_0 = arith.constant 0 : i32
    %c0_i32_1 = arith.constant 0 : i32
    return %arg0, %c0_i32, %c0_i32_0 : i32, i32, i32
  }
  func.func @transform_1(%arg0: i32) -> (i32, i32, i32) {
    %c0_i32 = arith.constant 0 : i32
    %c0_i32_0 = arith.constant 0 : i32
    %c0_i32_1 = arith.constant 0 : i32
    return %arg0, %c0_i32, %c0_i32_0 : i32, i32, i32
  }
  func.func @transform_2(%arg0: i32) -> (i32, i32) {
    %c0_i32 = arith.constant 0 : i32
    %c0_i32_0 = arith.constant 0 : i32
    %c0_i32_1 = arith.constant 0 : i32
    return %c0_i32, %c0_i32_0 : i32, i32
  }
  func.func @transform_3(%arg0: i32) -> (i32, i32) {
    %c0_i32 = arith.constant 0 : i32
    %c0_i32_0 = arith.constant 0 : i32
    %c0_i32_1 = arith.constant 0 : i32
    return %c0_i32, %c0_i32_0 : i32, i32
  }
  func.func @transform_4(%arg0: i32) -> (i32, i32) {
    %c0_i32 = arith.constant 0 : i32
    %c0_i32_0 = arith.constant 0 : i32
    %c0_i32_1 = arith.constant 0 : i32
    return %c0_i32, %c0_i32_0 : i32, i32
  }
  func.func @transform_5(%arg0: i32) -> (i32, i32, i32) {
    %c0_i32 = arith.constant 0 : i32
    %c0_i32_0 = arith.constant 0 : i32
    %c0_i32_1 = arith.constant 0 : i32
    return %arg0, %c0_i32, %c0_i32_0 : i32, i32, i32
  }
  func.func @transform_6(%arg0: i32) -> (i32, i32, i32) {
    %c0_i32 = arith.constant 0 : i32
    %c0_i32_0 = arith.constant 0 : i32
    %c0_i32_1 = arith.constant 0 : i32
    return %arg0, %c0_i32, %c0_i32_0 : i32, i32, i32
  }
}

</mosaic_0001>

<llo_original>
// kernel: tpu_custom_call.1
$region0: #{tpu_custom_call.1}
  #allocation0 [shape = 'u32[]', space=smem, size = 0x4, offset = 0x4, fixed_abs, tag = 'smem constant byte address 0x4 - core index']
  #allocation1 [shape = 'u32[144,128]{1,0:T(1,128)}', space=vmem, size = 0x12000, scoped, tag = 'internal scratch']
  %s0 = inlined_call_operand.hbm [shape: bf16[2,16,32], index: 0, kind: input, shape index: {}]
  %s1 = inlined_call_operand.hbm [shape: f32[2,1,32], index: 1, kind: input, shape index: {}]
  %s2 = inlined_call_operand.hbm [shape: bf16[32,32], index: 2, kind: input, shape index: {}]
  %s3 = inlined_call_operand.vmem [shape: f32[1,32], index: 3, kind: input, shape index: {}]
  %s4 = inlined_call_operand.vmem [shape: f32[1,32], index: 4, kind: input, shape index: {}]
  %s5 = inlined_call_operand.hbm [shape: f32[2,1,32], index: 5, kind: output, shape index: {0}]
  %s6 = inlined_call_operand.hbm [shape: f32[2,1,16], index: 6, kind: output, shape index: {1}]
  %7 = xla_tuple %s5, %s6
  %s8 = sld [smem:[#allocation0]]
  $region50: #{tpu_custom_call.1} parent=0
    _
  %s10 = ssub.s32 1, %s8
  %s11 = scalar_select 0, %s10, %s8
  $region1: #{tpu_custom_call.1} parent=0
    #allocation2 [shape = 'u8[8192]{0}', space=vmem, size = 0x2000, scoped, tag = 'input window, operand 0, single buffered']
    #allocation3 [shape = 's32[1]{0}', space=sflag, size = 0x4, scoped, tag = 'scoped memory for tpu_custom_call.1']
    #allocation4 [shape = 's32[1]{0}', space=sflag, size = 0x4, scoped, tag = 'scoped memory for tpu_custom_call.1']
    #allocation5 [shape = 'u8[1024]{0}', space=vmem, size = 0x400, scoped, tag = 'input window, operand 1, single buffered']
    #allocation6 [shape = 's32[1]{0}', space=sflag, size = 0x4, scoped, tag = 'scoped memory for tpu_custom_call.1']
    #allocation7 [shape = 'u8[8192]{0}', space=vmem, size = 0x2000, scoped, tag = 'input window, operand 2, single buffered']
    #allocation8 [shape = 'u8[1024]{0}', space=vmem, size = 0x400, scoped, tag = 'output window, operand 0, single buffered']
    #allocation9 [shape = 'u8[1024]{0}', space=vmem, size = 0x400, scoped, tag = 'output window, operand 1, single buffered']
    #allocation10 [shape = 's32[1]{0}', space=sflag, size = 0x4, scoped, tag = 'scoped memory for tpu_custom_call.1']
    %12 = vsyncpa [#allocation3], 0
    %13 = vsyncpa [#allocation6], 0
    %14 = vsyncpa [#allocation4], 0
    %15 = vsyncpa [#allocation10], 0
    // Predicated region
    $region2: #{tpu_custom_call.1} parent=1 // pred_check
      _
    $region3: #{tpu_custom_call.1} parent=1 // pred_check_branch
      %17 = sbr.rel (0) target = $region5
    $region4: #{tpu_custom_call.1} parent=1 // pred_region
      %s19 = ssub.s32 256, 256
      %20 = vsyncadd [#allocation3], %s19
      %s21 = sshll.u32 [#allocation2], 4
      %s22 = int_to_ptr.vmem [resolvable:$true] %s21
      %27 = dma.hbm_to_vmem [thread:$0]  %s0, 256, %s22, [#allocation3], 64, 64, 4
    $region5: #{tpu_custom_call.1} parent=1 // pred_fallthru
      _
    // Predicated region
    $region6: #{tpu_custom_call.1} parent=1 // pred_check
      _
    $region7: #{tpu_custom_call.1} parent=1 // pred_check_branch
      %29 = sbr.rel (0) target = $region9
    $region8: #{tpu_custom_call.1} parent=1 // pred_region
      %s31 = ssub.s32 32, 32
      %32 = vsyncadd [#allocation6], %s31
      %s33 = sshll.u32 [#allocation5], 4
      %s34 = int_to_ptr.vmem [resolvable:$true] %s33
      %39 = dma.hbm_to_vmem [thread:$0]  %s1, 32, %s34, [#allocation6], 16, 16, 1
    $region9: #{tpu_custom_call.1} parent=1 // pred_fallthru
      _
    // Predicated region
    $region10: #{tpu_custom_call.1} parent=1 // pred_check
      _
    $region11: #{tpu_custom_call.1} parent=1 // pred_check_branch
      %41 = sbr.rel (0) target = $region13
    $region12: #{tpu_custom_call.1} parent=1 // pred_region
      %s43 = ssub.s32 256, 256
      %44 = vsyncadd [#allocation6], %s43
      %s45 = sshll.u32 [#allocation7], 4
      %s46 = int_to_ptr.vmem [resolvable:$true] %s45
      %51 = dma.hbm_to_vmem [thread:$0]  %s2, 256, %s46, [#allocation6], 64, 64, 4
    $region13: #{tpu_custom_call.1} parent=1 // pred_fallthru
      _
    // Predicated region
    $region14: #{tpu_custom_call.1} parent=1 // pred_check
      _
    $region15: #{tpu_custom_call.1} parent=1 // pred_check_branch
      %53 = sbr.rel (0) target = $region17
    $region16: #{tpu_custom_call.1} parent=1 // pred_region
      _
    $region17: #{tpu_custom_call.1} parent=1 // pred_fallthru
      _
    // Predicated region
    $region18: #{tpu_custom_call.1} parent=1 // pred_check
      _
    $region19: #{tpu_custom_call.1} parent=1 // pred_check_branch
      %55 = sbr.rel (0) target = $region21
    $region20: #{tpu_custom_call.1} parent=1 // pred_region
      _
    $region21: #{tpu_custom_call.1} parent=1 // pred_fallthru
      _
    // Predicated region
    $region22: #{tpu_custom_call.1} parent=1 // pred_check
      _
    $region23: #{tpu_custom_call.1} parent=1 // pred_check_branch
      %57 = sbr.rel (0) target = $region25
    $region24: #{tpu_custom_call.1} parent=1 // pred_region
      %58 = dma.done [#allocation3], 256
    $region25: #{tpu_custom_call.1} parent=1 // pred_fallthru
      _
    // Predicated region
    $region26: #{tpu_custom_call.1} parent=1 // pred_check
      _
    $region27: #{tpu_custom_call.1} parent=1 // pred_check_branch
      %60 = sbr.rel (0) target = $region29
    $region28: #{tpu_custom_call.1} parent=1 // pred_region
      %61 = dma.done [#allocation6], 32
    $region29: #{tpu_custom_call.1} parent=1 // pred_fallthru
      _
    // Predicated region
    $region30: #{tpu_custom_call.1} parent=1 // pred_check
      _
    $region31: #{tpu_custom_call.1} parent=1 // pred_check_branch
      %63 = sbr.rel (0) target = $region33
    $region32: #{tpu_custom_call.1} parent=1 // pred_region
      %64 = dma.done [#allocation6], 256
    $region33: #{tpu_custom_call.1} parent=1 // pred_fallthru
      _
    %v66 = vld [vmem:[#allocation2] sm:$0xf]
    %v67 = vld [vmem:[#allocation2 + $0x4] sm:$0xf]
    %v68 = vld [vmem:[#allocation2 + $0x8] sm:$0xf]
    %v69 = vld [vmem:[#allocation2 + $0xc] sm:$0xf]
    %v70 = vld [vmem:[#allocation7] sm:$0xf]
    %v71 = vld [vmem:[#allocation7 + $0x4] sm:$0xf]
    %v72 = vld [vmem:[#allocation7 + $0x8] sm:$0xf]
    %v73 = vld [vmem:[#allocation7 + $0xc] sm:$0xf]
    %v78 = vunpack.c.l.b16 %v66
    %v79 = vunpack.c.l.b16 %v67
    %v80 = vunpack.c.l.b16 %v68
    %v81 = vunpack.c.l.b16 %v69
    %v82 = vpack.c.b16 %v79, %v78
    %v83 = vpack.c.b16 %v81, %v80
    %v88 = vunpack.c.l.b16 %v70
    %v89 = vunpack.c.l.b16 %v71
    %v90 = vunpack.c.l.b16 %v72
    %v91 = vunpack.c.l.b16 %v73
    %v92 = vpack.c.b16 %v89, %v88
    %v93 = vpack.c.b16 %v91, %v90
    %vm96 = vcmask 261120
    %v98 = vsel %vm96, %v82, 0
    %v101 = vsel %vm96, %v83, 0
    %103 = vmatprep.subr.bf16.mxu0 0
    %104 = vmatpush1.bf16.msra.mxu0 0
    %105 = vmatprep.subr.bf16.mxu0 0
    %106 = vmatpush1.bf16.msra.mxu0 0
    %107 = vmatprep.subr.bf16.mxu0 0
    %108 = vmatpush1.bf16.msra.mxu0 0
    %109 = vmatprep.subr.bf16.mxu0 0
    %110 = vmatpush1.bf16.msra.mxu0 0
    %111 = vmatprep.subr.bf16.mxu0 0
    %112 = vmatpush1.bf16.msra.mxu0 0
    %113 = vmatprep.subr.bf16.mxu0 0
    %114 = vmatpush1.bf16.msra.mxu0 0
    %115 = vmatprep.subr.bf16.mxu0 0
    %116 = vmatpush1.bf16.msra.mxu0 %v93
    %117 = vmatprep.subr.bf16.mxu0 0
    %118 = vmatpush1.bf16.msra.mxu0 %v92
    %119 = vmatprep.subr.bf16.mxu0 0
    %120 = vmatpush2.bf16.msra.mxu0 0
    %121 = vmatprep.subr.bf16.mxu0 0
    %122 = vmatpush2.bf16.msra.mxu0 0
    %123 = vmatprep.subr.bf16.mxu0 0
    %124 = vmatpush2.bf16.msra.mxu0 0
    %125 = vmatprep.subr.bf16.mxu0 0
    %126 = vmatpush2.bf16.msra.mxu0 0
    %127 = vmatprep.subr.bf16.mxu0 0
    %128 = vmatpush2.bf16.msra.mxu0 0
    %129 = vmatprep.subr.bf16.mxu0 0
    %130 = vmatpush2.bf16.msra.mxu0 0
    %131 = vmatprep.subr.bf16.mxu0 0
    %132 = vmatpush2.bf16.msra.mxu0 0
    %133 = vmatprep.subr.bf16.mxu0 0
    %134 = vmatpush2.bf16.msra.mxu0 0
    %135 = vmatprep.mubr.bf16.mxu0 0
    %136 = vmatmul.mubr.bf16.gmra.mxu0 %v98
    %v137 = vpop.f32.mrf.mxu0
    %v138 = vadd.f32 0.0, %v137
    %v139 = vpop.f32.mrf.mxu0
    %v140 = vpop.f32.mrf.mxu0
    %v141 = vadd.f32 0.0, %v140
    %v142 = vpop.f32.mrf.mxu0
    %143 = vmatprep.mubr.bf16.mxu0 0
    %144 = vmatmul.mubr.bf16.gmra.mxu0 %v101
    %v145 = vpop.f32.mrf.mxu0
    %v146 = vadd.f32 0.0, %v145
    %v147 = vpop.f32.mrf.mxu0
    %v148 = vpop.f32.mrf.mxu0
    %v149 = vadd.f32 0.0, %v148
    %v150 = vpop.f32.mrf.mxu0
    %151 = vdwg.mxu0
    %v152 = vld [vmem:[%s3] sm:$0x1]
    %v154 = vlaneseq
    %v155 = vshrl.u32 %v154, 7
    %v156 = vsub.s32 0, %v155
    %v157 = vrot.slane %v152, %v156
    %v159 = vadd.f32 %v138, %v157
    %v160 = vadd.f32 %v141, %v157
    %v161 = vadd.f32 %v146, %v157
    %v162 = vadd.f32 %v149, %v157
    %v163 = vld [vmem:[#allocation5] sm:$0x1]
    %v164 = vld [vmem:[#allocation5 + $0x1] sm:$0x1]
    %v167 = vlaneseq
    %v168 = vshrl.u32 %v167, 7
    %v169 = vsub.s32 0, %v168
    %v170 = vrot.slane %v163, %v169
    %v171 = vlaneseq
    %v172 = vshrl.u32 %v171, 7
    %v173 = vsub.s32 0, %v172
    %v174 = vrot.slane %v164, %v173
    %v177 = vadd.f32 %v159, %v170
    %v178 = vadd.f32 %v160, %v170
    %v179 = vadd.f32 %v161, %v174
    %v180 = vadd.f32 %v162, %v174
    %v181 = vmax.f32 %v177, 0.0
    %v182 = vmax.f32 %v178, 0.0
    %v183 = vmax.f32 %v179, 0.0
    %v184 = vmax.f32 %v180, 0.0
    %v185 = vld [vmem:[%s4] sm:$0x1]
    %v187 = vlaneseq
    %v188 = vshrl.u32 %v187, 7
    %v189 = vsub.s32 0, %v188
    %v190 = vrot.slane %v185, %v189
    %v192 = vmul.f32 %v181, %v190
    %v193 = vmul.f32 %v182, %v190
    %v194 = vmul.f32 %v183, %v190
    %v195 = vmul.f32 %v184, %v190
    %v196 = vsel %vm96, %v192, 0.0
    %197 = vadd.xlane.f32.xlu0 %v196
    %v198 = vpop.xlane.xlu0 %197
    %v199 = vsel %vm96, %v193, 0.0
    %200 = vadd.xlane.f32.xlu0 %v199
    %v201 = vpop.xlane.xlu0 %200
    %v202 = vsel %vm96, %v194, 0.0
    %203 = vadd.xlane.f32.xlu0 %v202
    %v204 = vpop.xlane.xlu0 %203
    %v205 = vsel %vm96, %v195, 0.0
    %206 = vadd.xlane.f32.xlu0 %v205
    %v207 = vpop.xlane.xlu0 %206
    %v212 = vlaneseq
    %v213 = vand.u32 %v212, 127
    %v214 = vlaneseq
    %v215 = vshrl.u32 %v214, 7
    %v216 = vsub.s32 %v213, %v215
    %v217 = vrot.slane %v198, %v216
    %v218 = vadd.s32 %v213, 4294967288
    %v219 = vlaneseq
    %v220 = vshrl.u32 %v219, 7
    %v221 = vsub.s32 %v218, %v220
    %v222 = vrot.slane %v201, %v221
    %vm223 = vcmask 130112
    %v224 = vsel %vm223, %v222, %v217
    %v225 = vlaneseq
    %v226 = vshrl.u32 %v225, 7
    %v227 = vsub.s32 %v213, %v226
    %v228 = vrot.slane %v204, %v227
    %v229 = vlaneseq
    %v230 = vshrl.u32 %v229, 7
    %v231 = vsub.s32 %v218, %v230
    %v232 = vrot.slane %v207, %v231
    %v233 = vsel %vm223, %v232, %v228
    %vm234 = vcmask 1041409
    %v235 = vsel %vm234, %v233, %v224
    %vm237 = vcmask 123904
    %v238 = vsel %vm237, %v235, -inf
    %239 = vmax.xlane.f32.xlu0 %v238
    %v240 = vpop.xlane.xlu0 %239
    %v242 = vlaneseq
    %v243 = vshrl.u32 %v242, 7
    %v244 = vsub.s32 0, %v243
    %v245 = vrot.slane %v240, %v244
    %v246 = vlaneseq
    %v247 = vshrl.u32 %v246, 7
    %v248 = vsub.s32 1, %v247
    %v249 = vrot.slane %v240, %v248
    %v252 = vsub.f32 %v198, %v245
    %v253 = vsub.f32 %v201, %v245
    %v254 = vsub.f32 %v204, %v249
    %v255 = vsub.f32 %v207, %v249
    %v256 = vmul.f32 %v252, 1.442695
    %v257 = vpow.pop %v256
    %v258 = vmul.f32 %v253, 1.442695
    %v259 = vpow.pop %v258
    %v260 = vmul.f32 %v254, 1.442695
    %v261 = vpow.pop %v260
    %v262 = vmul.f32 %v255, 1.442695
    %v263 = vpow.pop %v262
    %268 = vset.pattern.permute.xlu0 0
    %269 = vperm.xlu0 %268, %v257
    %v270 = vpop.permute.xlu0 %269
    %271 = vset.pattern.permute.xlu0 0
    %272 = vperm.xlu0 %271, %v259
    %v273 = vpop.permute.xlu0 %272
    %274 = vset.pattern.permute.xlu0 0
    %275 = vperm.xlu0 %274, %v261
    %v276 = vpop.permute.xlu0 %275
    %277 = vset.pattern.permute.xlu0 0
    %278 = vperm.xlu0 %277, %v263
    %v279 = vpop.permute.xlu0 %278
    %v280 = vlaneseq
    %v281 = vshrl.u32 %v280, 7
    %v282 = vsub.s32 %v213, %v281
    %v283 = vrot.slane %v270, %v282
    %v284 = vlaneseq
    %v285 = vshrl.u32 %v284, 7
    %v286 = vsub.s32 %v218, %v285
    %v287 = vrot.slane %v273, %v286
    %v288 = vsel %vm223, %v287, %v283
    %v289 = vlaneseq
    %v290 = vshrl.u32 %v289, 7
    %v291 = vsub.s32 %v213, %v290
    %v292 = vrot.slane %v276, %v291
    %v293 = vlaneseq
    %v294 = vshrl.u32 %v293, 7
    %v295 = vsub.s32 %v218, %v294
    %v296 = vrot.slane %v279, %v295
    %v297 = vsel %vm223, %v296, %v292
    %v298 = vsel %vm234, %v297, %v288
    %v300 = vsel %vm237, %v298, 0.0
    %301 = vadd.xlane.f32.xlu0 %v300
    %v302 = vpop.xlane.xlu0 %301
    %v303 = vrcp.pop %v302
    %v305 = vlaneseq
    %v306 = vshrl.u32 %v305, 7
    %v307 = vsub.s32 0, %v306
    %v308 = vrot.slane %v303, %v307
    %v309 = vlaneseq
    %v310 = vshrl.u32 %v309, 7
    %v311 = vsub.s32 1, %v310
    %v312 = vrot.slane %v303, %v311
    %v315 = vmul.f32 %v257, %v308
    %v316 = vmul.f32 %v259, %v308
    %v317 = vmul.f32 %v261, %v312
    %v318 = vmul.f32 %v263, %v312
    %v319 = vpack.c.bf16 %v316, %v315
    %v320 = vpack.c.bf16 %v318, %v317
    %v322 = vunpack.c.l.b16 %v319
    %v323 = vunpack.c.h.b16 %v319
    %324 = vset.pattern.permute.xlu0 0
    %325 = vperm.xlu0 %324, %v322
    %v326 = vpop.permute.xlu0 %325
    %327 = vset.pattern.permute.xlu0 0
    %328 = vperm.xlu0 %327, %v323
    %v329 = vpop.permute.xlu0 %328
    %v330 = vlaneseq
    %v331 = vshrl.u32 %v330, 7
    %v332 = vsub.s32 %v213, %v331
    %v333 = vrot.slane %v326, %v332
    %v334 = vlaneseq
    %v335 = vshrl.u32 %v334, 7
    %v336 = vsub.s32 %v218, %v335
    %v337 = vrot.slane %v329, %v336
    %v338 = vsel %vm223, %v337, %v333
    %v339 = vpack.c.b16 %v338, %v338
    %vm341 = vcmask 130048
    %v343 = vsel %vm341, %v339, 0
    %345 = vmatprep.subr.bf16.mxu0 0
    %346 = vmatpush1.bf16.msra.mxu0 0
    %347 = vmatprep.subr.bf16.mxu0 0
    %348 = vmatpush1.bf16.msra.mxu0 0
    %349 = vmatprep.subr.bf16.mxu0 0
    %350 = vmatpush1.bf16.msra.mxu0 0
    %351 = vmatprep.subr.bf16.mxu0 0
    %352 = vmatpush1.bf16.msra.mxu0 0
    %353 = vmatprep.subr.bf16.mxu0 0
    %354 = vmatpush1.bf16.msra.mxu0 0
    %355 = vmatprep.subr.bf16.mxu0 0
    %356 = vmatpush1.bf16.msra.mxu0 0
    %357 = vmatprep.subr.bf16.mxu0 0
    %358 = vmatpush1.bf16.msra.mxu0 0
    %359 = vmatprep.subr.bf16.mxu0 0
    %360 = vmatpush1.bf16.msra.mxu0 %v82
    %361 = vmatprep.subr.bf16.mxu0 0
    %362 = vmatpush2.bf16.msra.mxu0 0
    %363 = vmatprep.subr.bf16.mxu0 0
    %364 = vmatpush2.bf16.msra.mxu0 0
    %365 = vmatprep.subr.bf16.mxu0 0
    %366 = vmatpush2.bf16.msra.mxu0 0
    %367 = vmatprep.subr.bf16.mxu0 0
    %368 = vmatpush2.bf16.msra.mxu0 0
    %369 = vmatprep.subr.bf16.mxu0 0
    %370 = vmatpush2.bf16.msra.mxu0 0
    %371 = vmatprep.subr.bf16.mxu0 0
    %372 = vmatpush2.bf16.msra.mxu0 0
    %373 = vmatprep.subr.bf16.mxu0 0
    %374 = vmatpush2.bf16.msra.mxu0 0
    %375 = vmatprep.subr.bf16.mxu0 0
    %376 = vmatpush2.bf16.msra.mxu0 0
    %377 = vmatprep.mubr.bf16.mxu0 0
    %378 = vmatmul.mubr.bf16.gmra.mxu0 %v343
    %v379 = vpop.f32.mrf.mxu0
    %v380 = vadd.f32 0.0, %v379
    %v381 = vpop.f32.mrf.mxu0
    %v382 = vpop.f32.mrf.mxu0
    %v383 = vpop.f32.mrf.mxu0
    %384 = vdwg.mxu0
    %v386 = vunpack.c.l.b16 %v320
    %v387 = vunpack.c.h.b16 %v320
    %388 = vset.pattern.permute.xlu0 0
    %389 = vperm.xlu0 %388, %v386
    %v390 = vpop.permute.xlu0 %389
    %391 = vset.pattern.permute.xlu0 0
    %392 = vperm.xlu0 %391, %v387
    %v393 = vpop.permute.xlu0 %392
    %v394 = vlaneseq
    %v395 = vshrl.u32 %v394, 7
    %v396 = vsub.s32 %v213, %v395
    %v397 = vrot.slane %v390, %v396
    %v398 = vlaneseq
    %v399 = vshrl.u32 %v398, 7
    %v400 = vsub.s32 %v218, %v399
    %v401 = vrot.slane %v393, %v400
    %v402 = vsel %vm223, %v401, %v397
    %v403 = vpack.c.b16 %v402, %v402
    %v406 = vsel %vm341, %v403, 0
    %408 = vmatprep.subr.bf16.mxu0 0
    %409 = vmatpush1.bf16.msra.mxu0 0
    %410 = vmatprep.subr.bf16.mxu0 0
    %411 = vmatpush1.bf16.msra.mxu0 0
    %412 = vmatprep.subr.bf16.mxu0 0
    %413 = vmatpush1.bf16.msra.mxu0 0
    %414 = vmatprep.subr.bf16.mxu0 0
    %415 = vmatpush1.bf16.msra.mxu0 0
    %416 = vmatprep.subr.bf16.mxu0 0
    %417 = vmatpush1.bf16.msra.mxu0 0
    %418 = vmatprep.subr.bf16.mxu0 0
    %419 = vmatpush1.bf16.msra.mxu0 0
    %420 = vmatprep.subr.bf16.mxu0 0
    %421 = vmatpush1.bf16.msra.mxu0 0
    %422 = vmatprep.subr.bf16.mxu0 0
    %423 = vmatpush1.bf16.msra.mxu0 %v83
    %424 = vmatprep.subr.bf16.mxu0 0
    %425 = vmatpush2.bf16.msra.mxu0 0
    %426 = vmatprep.subr.bf16.mxu0 0
    %427 = vmatpush2.bf16.msra.mxu0 0
    %428 = vmatprep.subr.bf16.mxu0 0
    %429 = vmatpush2.bf16.msra.mxu0 0
    %430 = vmatprep.subr.bf16.mxu0 0
    %431 = vmatpush2.bf16.msra.mxu0 0
    %432 = vmatprep.subr.bf16.mxu0 0
    %433 = vmatpush2.bf16.msra.mxu0 0
    %434 = vmatprep.subr.bf16.mxu0 0
    %435 = vmatpush2.bf16.msra.mxu0 0
    %436 = vmatprep.subr.bf16.mxu0 0
    %437 = vmatpush2.bf16.msra.mxu0 0
    %438 = vmatprep.subr.bf16.mxu0 0
    %439 = vmatpush2.bf16.msra.mxu0 0
    %440 = vmatprep.mubr.bf16.mxu0 0
    %441 = vmatmul.mubr.bf16.gmra.mxu0 %v406
    %v442 = vpop.f32.mrf.mxu0
    %v443 = vadd.f32 0.0, %v442
    %v444 = vpop.f32.mrf.mxu0
    %v445 = vpop.f32.mrf.mxu0
    %v446 = vpop.f32.mrf.mxu0
    %447 = vdwg.mxu0
    %vm448 = vcmask 253952
    %449 = vst.msk [vmem:[#allocation8] sm:$0x1] %vm448, %v380
    %450 = vst.msk [vmem:[#allocation8 + $0x1] sm:$0x1] %vm448, %v443
    %455 = vset.pattern.permute.xlu0 0
    %456 = vperm.xlu0 %455, %v315
    %v457 = vpop.permute.xlu0 %456
    %458 = vset.pattern.permute.xlu0 0
    %459 = vperm.xlu0 %458, %v316
    %v460 = vpop.permute.xlu0 %459
    %461 = vset.pattern.permute.xlu0 0
    %462 = vperm.xlu0 %461, %v317
    %v463 = vpop.permute.xlu0 %462
    %464 = vset.pattern.permute.xlu0 0
    %465 = vperm.xlu0 %464, %v318
    %v466 = vpop.permute.xlu0 %465
    %v467 = vlaneseq
    %v468 = vshrl.u32 %v467, 7
    %v469 = vsub.s32 %v213, %v468
    %v470 = vrot.slane %v457, %v469
    %v471 = vlaneseq
    %v472 = vshrl.u32 %v471, 7
    %v473 = vsub.s32 %v218, %v472
    %v474 = vrot.slane %v460, %v473
    %v475 = vsel %vm223, %v474, %v470
    %v476 = vlaneseq
    %v477 = vshrl.u32 %v476, 7
    %v478 = vsub.s32 %v213, %v477
    %v479 = vrot.slane %v463, %v478
    %v480 = vlaneseq
    %v481 = vshrl.u32 %v480, 7
    %v482 = vsub.s32 %v218, %v481
    %v483 = vrot.slane %v466, %v482
    %v484 = vsel %vm223, %v483, %v479
    %vm487 = vcmask 122880
    %488 = vst.msk [vmem:[#allocation9] sm:$0x1] %vm487, %v475
    %489 = vst.msk [vmem:[#allocation9 + $0x1] sm:$0x1] %vm487, %v484
    // Predicated region
    $region34: #{tpu_custom_call.1} parent=1 // pred_check
      _
    $region35: #{tpu_custom_call.1} parent=1 // pred_check_branch
      %491 = sbr.rel (0) target = $region37
    $region36: #{tpu_custom_call.1} parent=1 // pred_region
      %s493 = ssub.s32 32, 32
      %494 = vsyncadd [#allocation4], %s493
      %s495 = sshll.u32 [#allocation8], 4
      %s496 = int_to_ptr.vmem [resolvable:$true] %s495
      %501 = dma.vmem_to_hbm [thread:$0]  %s496, 32, %s5, [#allocation4], 16, 16, 1
    $region37: #{tpu_custom_call.1} parent=1 // pred_fallthru
      _
    // Predicated region
    $region38: #{tpu_custom_call.1} parent=1 // pred_check
      _
    $region39: #{tpu_custom_call.1} parent=1 // pred_check_branch
      %503 = sbr.rel (0) target = $region41
    $region40: #{tpu_custom_call.1} parent=1 // pred_region
      %s505 = ssub.s32 32, 32
      %506 = vsyncadd [#allocation10], %s505
      %s507 = sshll.u32 [#allocation9], 4
      %s508 = int_to_ptr.vmem [resolvable:$true] %s507
      %513 = dma.vmem_to_hbm [thread:$0]  %s508, 32, %s6, [#allocation10], 16, 16, 1
    $region41: #{tpu_custom_call.1} parent=1 // pred_fallthru
      _
    // Predicated region
    $region42: #{tpu_custom_call.1} parent=1 // pred_check
      _
    $region43: #{tpu_custom_call.1} parent=1 // pred_check_branch
      %515 = sbr.rel (0) target = $region45
    $region44: #{tpu_custom_call.1} parent=1 // pred_region
      %516 = dma.done [#allocation4], 32
    $region45: #{tpu_custom_call.1} parent=1 // pred_fallthru
      _
    // Predicated region
    $region46: #{tpu_custom_call.1} parent=1 // pred_check
      _
    $region47: #{tpu_custom_call.1} parent=1 // pred_check_branch
      %518 = sbr.rel (0) target = $region49
    $region48: #{tpu_custom_call.1} parent=1 // pred_region
      %519 = dma.done [#allocation10], 32
    $region49: #{tpu_custom_call.1} parent=1 // pred_fallthru
      _
    %520 = vsyncpa [#allocation3], 1
    %521 = vsyncpa [#allocation6], 1
    %522 = vsyncpa [#allocation4], 1
    %523 = vsyncpa [#allocation10], 1

</llo_original>
